<compile_context>
chip_gen: v5e
topology: v5e:2x2
jax: 0.10.0
libtpu: 0.0.40
codegen_flags: <defaults>
</compile_context>

<pallas_src>
import jax
import jax.numpy as jnp
from jax import lax
from jax.experimental import pallas as pl
from jax.experimental.pallas import tpu as pltpu


def _generator_step_kernel(xt_ref, h_ref, wih_ref, whh_ref, bih_ref, bhh_ref,
                           wlin_ref, blin_ref, g_ref,
                           zh_ref, hnew_ref, gnew_ref):
    x = xt_ref[...]            # (1, V)   f32
    h = h_ref[...]             # (1, HP)  f32, pad lanes are 0
    HP = h.shape[1]

    # --- fused GRU gates (PyTorch convention, gate order r|z|n along lanes) ---
    gi = jnp.dot(x, wih_ref[...], preferred_element_type=jnp.float32) + bih_ref[...]  # (1, 3*HP)
    gh = jnp.dot(h, whh_ref[...], preferred_element_type=jnp.float32) + bhh_ref[...]  # (1, 3*HP)

    r = jax.nn.sigmoid(gi[:, 0:HP] + gh[:, 0:HP])
    z = jax.nn.sigmoid(gi[:, HP:2 * HP] + gh[:, HP:2 * HP])
    n = jnp.tanh(gi[:, 2 * HP:3 * HP] + r * gh[:, 2 * HP:3 * HP])
    h_new = (1.0 - z) * n + z * h                       # (1, HP); pad lanes stay 0
    hnew_ref[...] = h_new

    # --- output linear; sigmoid only for the returned distribution ---
    logits = jnp.dot(h_new, wlin_ref[...], preferred_element_type=jnp.float32) + blin_ref[...]  # (1, V)
    zh_ref[...] = jax.nn.sigmoid(logits)

    # --- greedy medicine update: g[argmax] = 1.
    # argmax taken on logits (sigmoid is monotone => identical index);
    # first-index tie-break, matching torch.max(dim=0).indices.
    V = logits.shape[1]
    lane_ids = lax.broadcasted_iota(jnp.int32, logits.shape, 1)        # (1, V)
    max_val = jnp.max(logits, axis=1, keepdims=True)                   # (1, 1)
    idx = jnp.min(jnp.where(logits == max_val, lane_ids, jnp.int32(V)),
                  axis=1, keepdims=True)                               # (1, 1)
    g = g_ref[...]                                                     # (1, V) i32
    gnew_ref[...] = jnp.where(lane_ids == idx, jnp.int32(1), g)


def prepare_fused_params(params, hidden_size):
    """Fuse per-gate GRU weights into lane-dense (·, 3*HP) slabs; pad H -> HP."""
    H = hidden_size
    HP = ((H + 127) // 128) * 128          # lane-dense hidden width (>= 128)
    W_ih, W_hh = params["W_ih"], params["W_hh"]          # (3, V, H), (3, H, H)
    b_ih, b_hh = params["b_ih"], params["b_hh"]          # (3, 1, H)
    W_lin, b_lin = params["W_lin"], params["b_lin"]      # (H, V), (1, V)
    V = W_ih.shape[1]

    wih_f = jnp.zeros((V, 3 * HP), jnp.float32)
    whh_f = jnp.zeros((HP, 3 * HP), jnp.float32)
    bih_f = jnp.zeros((1, 3 * HP), jnp.float32)
    bhh_f = jnp.zeros((1, 3 * HP), jnp.float32)
    for k in range(3):                                   # gate order r, z, n
        wih_f = wih_f.at[:, k * HP:k * HP + H].set(W_ih[k].astype(jnp.float32))
        whh_f = whh_f.at[:H, k * HP:k * HP + H].set(W_hh[k].astype(jnp.float32))
        bih_f = bih_f.at[:, k * HP:k * HP + H].set(b_ih[k].astype(jnp.float32))
        bhh_f = bhh_f.at[:, k * HP:k * HP + H].set(b_hh[k].astype(jnp.float32))
    wlin_f = jnp.zeros((HP, V), jnp.float32).at[:H, :].set(W_lin.astype(jnp.float32))

    return {"W_ih_f": wih_f, "W_hh_f": whh_f, "b_ih_f": bih_f, "b_hh_f": bhh_f,
            "W_lin_f": wlin_f, "b_lin": b_lin.astype(jnp.float32),
            "H": H, "HP": HP, "V": V}


def generator_forward(xt, h, g, fused):
    """xt: (1, V) f32, h: (1, 1, H) f32, g: (V,) int32.

    Returns (zh_t (V,), h_t (1, 1, H), g (V,)) with the same semantics as
    Generator.forward in the PyTorch module.
    """
    V, H, HP = fused["V"], fused["H"], fused["HP"]
    xt2 = xt.reshape(1, V).astype(jnp.float32)
    h2 = jnp.zeros((1, HP), jnp.float32).at[:, :H].set(
        h.reshape(1, H).astype(jnp.float32))
    g2 = g.reshape(1, V).astype(jnp.int32)

    vspec = pl.BlockSpec(memory_space=pltpu.MemorySpace.VMEM)
    out_shapes = (
        jax.ShapeDtypeStruct((1, V), jnp.float32),    # zh_t
        jax.ShapeDtypeStruct((1, HP), jnp.float32),   # h_t (lane-padded)
        jax.ShapeDtypeStruct((1, V), jnp.int32),      # g   (in-place alias)
    )
    zh, h_new, g_new = pl.pallas_call(
        _generator_step_kernel,
        out_shape=out_shapes,
        in_specs=[vspec] * 9,
        out_specs=(vspec, vspec, vspec),
        input_output_aliases={8: 2},                   # g input buffer -> g output
        compiler_params=pltpu.CompilerParams(),
    )(xt2, h2,
      fused["W_ih_f"], fused["W_hh_f"], fused["b_ih_f"], fused["b_hh_f"],
      fused["W_lin_f"], fused["b_lin"], g2)

    return zh.reshape(V), h_new[:, :H].reshape(1, 1, H), g_new.reshape(V)


def _reference_forward(xt, h, g, params):
    """Pure-JAX reference with identical semantics (for correctness check)."""
    x = xt.reshape(1, -1).astype(jnp.float32)
    hh = h.reshape(1, -1).astype(jnp.float32)
    r = jax.nn.sigmoid(x @ params["W_ih"][0] + params["b_ih"][0]
                       + hh @ params["W_hh"][0] + params["b_hh"][0])
    z = jax.nn.sigmoid(x @ params["W_ih"][1] + params["b_ih"][1]
                       + hh @ params["W_hh"][1] + params["b_hh"][1])
    n = jnp.tanh(x @ params["W_ih"][2] + params["b_ih"][2]
                 + r * (hh @ params["W_hh"][2] + params["b_hh"][2]))
    h_new = (1.0 - z) * n + z * hh
    zh = jax.nn.sigmoid(h_new @ params["W_lin"] + params["b_lin"]).reshape(-1)
    idx = jnp.argmax(zh)
    g_new = g.at[idx].set(1)
    return zh, h_new.reshape(1, 1, -1), g_new


def init_params(key, vocab_medicine, hidden_size):
    ks = jax.random.split(key, 8)
    s = 1.0 / jnp.sqrt(hidden_size)
    return {
        "W_ih": jax.random.uniform(ks[0], (3, vocab_medicine, hidden_size), jnp.float32, -s, s),
        "W_hh": jax.random.uniform(ks[1], (3, hidden_size, hidden_size), jnp.float32, -s, s),
        "b_ih": jax.random.uniform(ks[2], (3, 1, hidden_size), jnp.float32, -s, s),
        "b_hh": jax.random.uniform(ks[3], (3, 1, hidden_size), jnp.float32, -s, s),
        "W_lin": jax.random.uniform(ks[4], (hidden_size, vocab_medicine), jnp.float32, -s, s),
        "b_lin": jax.random.uniform(ks[5], (1, vocab_medicine), jnp.float32, -s, s),
    }


# TODO(synk): the HSU/CIE front-end (embedding means over Python code lists +
# 1x1-conv CNN + log-softmax attention) that produces xt upstream is plain-JAX /
# host glue in the full model and is not part of Generator.forward; it is not
# reproduced here.
# TODO(synk): the decode loop (batch_loss / sample) cannot be fused into the
# kernel as a grid/fori_loop because xt at each step depends on HSU(g) computed
# outside this module; fusing it would require also porting HSU into the kernel.


if __name__ == "__main__":
    VOCAB_MEDICINE = 128   # V (GRU input size & output vocab)
    HIDDEN_SIZE = 32       # H (GRU hidden size)

    key = jax.random.PRNGKey(0)
    kp, kx = jax.random.split(key)
    params = init_params(kp, VOCAB_MEDICINE, HIDDEN_SIZE)
    fused = prepare_fused_params(params, HIDDEN_SIZE)

    # xt = health-status representation at sequence t (row of HSU's output)
    xt = jax.random.normal(kx, (1, VOCAB_MEDICINE), jnp.float32)
    h0 = jnp.zeros((1, 1, HIDDEN_SIZE), jnp.float32)
    g0 = jnp.zeros((VOCAB_MEDICINE,), jnp.int32)

    # Run the pure-JAX reference first (g is updated in place by the kernel via
    # input/output aliasing, so keep the reference independent of that buffer).
    zh_ref, h_ref_, g_ref_ = _reference_forward(xt, h0, g0, params)
    jax.block_until_ready((zh_ref, h_ref_, g_ref_))

    zh_t, h_t, g = generator_forward(xt, h0, g0, fused)
    jax.block_until_ready((zh_t, h_t, g))

    assert jnp.allclose(zh_t, zh_ref, atol=1e-5), "zh_t mismatch"
    assert jnp.allclose(h_t, h_ref_, atol=1e-5), "h_t mismatch"
    assert jnp.array_equal(g, g_ref_), "g mismatch"

    print("KERNEL_OK")
</pallas_src>

<mosaic_0001>
module attributes {stable_mosaic.version = 11 : i64} {
  func.func @_generator_step_kernel(%arg0: memref<1x128xf32, #tpu.memory_space<vmem>>, %arg1: memref<1x128xf32, #tpu.memory_space<vmem>>, %arg2: memref<128x384xf32, #tpu.memory_space<vmem>>, %arg3: memref<128x384xf32, #tpu.memory_space<vmem>>, %arg4: memref<1x384xf32, #tpu.memory_space<vmem>>, %arg5: memref<1x384xf32, #tpu.memory_space<vmem>>, %arg6: memref<128x128xf32, #tpu.memory_space<vmem>>, %arg7: memref<1x128xf32, #tpu.memory_space<vmem>>, %arg8: memref<1x128xi32, #tpu.memory_space<vmem>>, %arg9: memref<1x128xf32, #tpu.memory_space<vmem>>, %arg10: memref<1x128xf32, #tpu.memory_space<vmem>>, %arg11: memref<1x128xi32, #tpu.memory_space<vmem>>) attributes {dimension_semantics = [], scalar_prefetch = 0 : i64, scratch_operands = 0 : i64, tpu.core_type = #tpu.core_type<tc>} {
    %c0 = arith.constant 0 : index
    %c0_0 = arith.constant 0 : index
    %0 = vector.load %arg0[%c0, %c0_0] : memref<1x128xf32, #tpu.memory_space<vmem>>, vector<1x128xf32>
    %c0_1 = arith.constant 0 : index
    %c0_2 = arith.constant 0 : index
    %1 = vector.load %arg1[%c0_1, %c0_2] : memref<1x128xf32, #tpu.memory_space<vmem>>, vector<1x128xf32>
    %c0_3 = arith.constant 0 : index
    %c0_4 = arith.constant 0 : index
    %2 = vector.load %arg2[%c0_3, %c0_4] : memref<128x384xf32, #tpu.memory_space<vmem>>, vector<128x384xf32>
    %cst = arith.constant dense<0.000000e+00> : vector<1x384xf32>
    %3 = tpu.matmul %0, %2, %cst {dimension_numbers = #tpu.dot_dimension_numbers<[1], [0], [0], [1], [0, 0, 1, 1], [], []>} : vector<1x128xf32>, vector<128x384xf32>, vector<1x384xf32> -> vector<1x384xf32>
    %c0_5 = arith.constant 0 : index
    %c0_6 = arith.constant 0 : index
    %4 = vector.load %arg4[%c0_5, %c0_6] : memref<1x384xf32, #tpu.memory_space<vmem>>, vector<1x384xf32>
    %5 = arith.addf %3, %4 : vector<1x384xf32>
    %c0_7 = arith.constant 0 : index
    %c0_8 = arith.constant 0 : index
    %6 = vector.load %arg3[%c0_7, %c0_8] : memref<128x384xf32, #tpu.memory_space<vmem>>, vector<128x384xf32>
    %cst_9 = arith.constant dense<0.000000e+00> : vector<1x384xf32>
    %7 = tpu.matmul %1, %6, %cst_9 {dimension_numbers = #tpu.dot_dimension_numbers<[1], [0], [0], [1], [0, 0, 1, 1], [], []>} : vector<1x128xf32>, vector<128x384xf32>, vector<1x384xf32> -> vector<1x384xf32>
    %c0_10 = arith.constant 0 : index
    %c0_11 = arith.constant 0 : index
    %8 = vector.load %arg5[%c0_10, %c0_11] : memref<1x384xf32, #tpu.memory_space<vmem>>, vector<1x384xf32>
    %9 = arith.addf %7, %8 : vector<1x384xf32>
    %10 = vector.extract_strided_slice %5 {offsets = [0, 0], sizes = [1, 128], strides = [1, 1]} : vector<1x384xf32> to vector<1x128xf32>
    %11 = vector.extract_strided_slice %9 {offsets = [0, 0], sizes = [1, 128], strides = [1, 1]} : vector<1x384xf32> to vector<1x128xf32>
    %12 = arith.addf %10, %11 : vector<1x128xf32>
    %13 = arith.negf %12 : vector<1x128xf32>
    %14 = math.exp %13 : vector<1x128xf32>
    %cst_12 = arith.constant 1.000000e+00 : f32
    %15 = vector.broadcast %cst_12 : f32 to vector<1x128xf32>
    %16 = arith.addf %15, %14 : vector<1x128xf32>
    %17 = arith.divf %15, %16 : vector<1x128xf32>
    %18 = vector.extract_strided_slice %5 {offsets = [0, 128], sizes = [1, 128], strides = [1, 1]} : vector<1x384xf32> to vector<1x128xf32>
    %19 = vector.extract_strided_slice %9 {offsets = [0, 128], sizes = [1, 128], strides = [1, 1]} : vector<1x384xf32> to vector<1x128xf32>
    %20 = arith.addf %18, %19 : vector<1x128xf32>
    %21 = arith.negf %20 : vector<1x128xf32>
    %22 = math.exp %21 : vector<1x128xf32>
    %cst_13 = arith.constant 1.000000e+00 : f32
    %23 = vector.broadcast %cst_13 : f32 to vector<1x128xf32>
    %24 = arith.addf %23, %22 : vector<1x128xf32>
    %25 = arith.divf %23, %24 : vector<1x128xf32>
    %26 = vector.extract_strided_slice %5 {offsets = [0, 256], sizes = [1, 128], strides = [1, 1]} : vector<1x384xf32> to vector<1x128xf32>
    %27 = vector.extract_strided_slice %9 {offsets = [0, 256], sizes = [1, 128], strides = [1, 1]} : vector<1x384xf32> to vector<1x128xf32>
    %28 = arith.mulf %17, %27 : vector<1x128xf32>
    %29 = arith.addf %26, %28 : vector<1x128xf32>
    %30 = math.tanh %29 : vector<1x128xf32>
    %cst_14 = arith.constant 1.000000e+00 : f32
    %31 = vector.broadcast %cst_14 : f32 to vector<1x128xf32>
    %32 = arith.subf %31, %25 : vector<1x128xf32>
    %33 = arith.mulf %32, %30 : vector<1x128xf32>
    %34 = arith.mulf %25, %1 : vector<1x128xf32>
    %35 = arith.addf %33, %34 : vector<1x128xf32>
    %c0_15 = arith.constant 0 : index
    %c0_16 = arith.constant 0 : index
    %36 = vector.load %arg10[%c0_15, %c0_16] : memref<1x128xf32, #tpu.memory_space<vmem>>, vector<1x128xf32>
    tpu.vector_store %arg10[%c0_15, %c0_16], %35 {strides = array<i32>} : memref<1x128xf32, #tpu.memory_space<vmem>>, vector<1x128xf32>,
    %c0_17 = arith.constant 0 : index
    %c0_18 = arith.constant 0 : index
    %37 = vector.load %arg6[%c0_17, %c0_18] : memref<128x128xf32, #tpu.memory_space<vmem>>, vector<128x128xf32>
    %cst_19 = arith.constant dense<0.000000e+00> : vector<1x128xf32>
    %38 = tpu.matmul %35, %37, %cst_19 {dimension_numbers = #tpu.dot_dimension_numbers<[1], [0], [0], [1], [0, 0, 1, 1], [], []>} : vector<1x128xf32>, vector<128x128xf32>, vector<1x128xf32> -> vector<1x128xf32>
    %c0_20 = arith.constant 0 : index
    %c0_21 = arith.constant 0 : index
    %39 = vector.load %arg7[%c0_20, %c0_21] : memref<1x128xf32, #tpu.memory_space<vmem>>, vector<1x128xf32>
    %40 = arith.addf %38, %39 : vector<1x128xf32>
    %41 = arith.negf %40 : vector<1x128xf32>
    %42 = math.exp %41 : vector<1x128xf32>
    %cst_22 = arith.constant 1.000000e+00 : f32
    %43 = vector.broadcast %cst_22 : f32 to vector<1x128xf32>
    %44 = arith.addf %43, %42 : vector<1x128xf32>
    %45 = arith.divf %43, %44 : vector<1x128xf32>
    %c0_23 = arith.constant 0 : index
    %c0_24 = arith.constant 0 : index
    %46 = vector.load %arg9[%c0_23, %c0_24] : memref<1x128xf32, #tpu.memory_space<vmem>>, vector<1x128xf32>
    tpu.vector_store %arg9[%c0_23, %c0_24], %45 {strides = array<i32>} : memref<1x128xf32, #tpu.memory_space<vmem>>, vector<1x128xf32>,
    %47 = tpu.iota {dimensions = array<i32: 1>} : vector<1x128xi32>
    %cst_25 = arith.constant dense<0xFF800000> : vector<1xf32>
    %48 = vector.multi_reduction <maximumf>, %40, %cst_25 [1] : vector<1x128xf32> to vector<1xf32>
    %49 = vector.shape_cast %48 : vector<1xf32> to vector<1x1xf32>
    %50 = vector.broadcast %49 : vector<1x1xf32> to vector<1x128xf32>
    %51 = arith.cmpf oeq, %40, %50 : vector<1x128xf32>
    %c128_i32 = arith.constant 128 : i32
    %52 = vector.broadcast %c128_i32 : i32 to vector<1x128xi32>
    %53 = arith.select %51, %47, %52 : vector<1x128xi1>, vector<1x128xi32>
    %cst_26 = arith.constant dense<2147483647> : vector<1xi32>
    %54 = vector.multi_reduction <minsi>, %53, %cst_26 [1] : vector<1x128xi32> to vector<1xi32>
    %55 = vector.shape_cast %54 : vector<1xi32> to vector<1x1xi32>
    %c0_27 = arith.constant 0 : index
    %c0_28 = arith.constant 0 : index
    %56 = vector.load %arg8[%c0_27, %c0_28] : memref<1x128xi32, #tpu.memory_space<vmem>>, vector<1x128xi32>
    %57 = vector.broadcast %55 : vector<1x1xi32> to vector<1x128xi32>
    %58 = arith.cmpi eq, %47, %57 : vector<1x128xi32>
    %c1_i32 = arith.constant 1 : i32
    %59 = vector.broadcast %c1_i32 : i32 to vector<1x128xi32>
    %60 = arith.select %58, %59, %56 : vector<1x128xi1>, vector<1x128xi32>
    %c0_29 = arith.constant 0 : index
    %c0_30 = arith.constant 0 : index
    %61 = vector.load %arg11[%c0_29, %c0_30] : memref<1x128xi32, #tpu.memory_space<vmem>>, vector<1x128xi32>
    tpu.vector_store %arg11[%c0_29, %c0_30], %60 {strides = array<i32>} : memref<1x128xi32, #tpu.memory_space<vmem>>, vector<1x128xi32>,
    return
  }
}

</mosaic_0001>

<llo_original>
// kernel: tpu_custom_call.1
$region0: #{tpu_custom_call.1}
  #allocation0 [shape = 'u32[]', space=smem, size = 0x4, offset = 0x4, fixed_abs, tag = 'smem constant byte address 0x4 - core index']
  #allocation1 [shape = 'u32[72,128]{1,0:T(1,128)}', space=vmem, size = 0x9000, scoped, tag = 'internal scratch']
  %s0 = inlined_call_operand.vmem [shape: f32[1,128], index: 0, kind: input, shape index: {}]
  %s1 = inlined_call_operand.vmem [shape: f32[1,128], index: 1, kind: input, shape index: {}]
  %s2 = inlined_call_operand.hbm [shape: f32[128,384], index: 2, kind: input, shape index: {}]
  %s3 = inlined_call_operand.hbm [shape: f32[128,384], index: 3, kind: input, shape index: {}]
  %s4 = inlined_call_operand.vmem [shape: f32[1,384], index: 4, kind: input, shape index: {}]
  %s5 = inlined_call_operand.hbm [shape: f32[1,384], index: 5, kind: input, shape index: {}]
  %s6 = inlined_call_operand.hbm [shape: f32[128,128], index: 6, kind: input, shape index: {}]
  %s7 = inlined_call_operand.hbm [shape: f32[1,128], index: 7, kind: input, shape index: {}]
  %s8 = inlined_call_operand.hbm [shape: s32[1,128], index: 8, kind: input, shape index: {}, may-alias: {8,11}]
  %s9 = inlined_call_operand.hbm [shape: f32[1,128], index: 9, kind: output, shape index: {0}]
  %s10 = inlined_call_operand.hbm [shape: f32[1,128], index: 10, kind: output, shape index: {1}]
  %s11 = inlined_call_operand.hbm [shape: s32[1,128], index: 11, kind: output, shape index: {2}, may-alias: {8,11}]
  %12 = xla_tuple %s9, %s10, %s11
  %s13 = sld [smem:[#allocation0]]
  $region86: #{tpu_custom_call.1} parent=0
    _
  %s15 = ssub.s32 1, %s13
  %s16 = scalar_select 0, %s15, %s13
  $region1: #{tpu_custom_call.1} parent=0
    #allocation2 [shape = 'u8[196608]{0}', space=vmem, size = 0x30000, scoped, tag = 'input window, operand 2, single buffered']
    #allocation3 [shape = 's32[1]{0}', space=sflag, size = 0x4, scoped, tag = 'scoped memory for tpu_custom_call.1']
    #allocation4 [shape = 's32[1]{0}', space=sflag, size = 0x4, scoped, tag = 'scoped memory for tpu_custom_call.1']
    #allocation5 [shape = 'u8[196608]{0}', space=vmem, size = 0x30000, scoped, tag = 'input window, operand 3, single buffered']
    #allocation6 [shape = 's32[1]{0}', space=sflag, size = 0x4, scoped, tag = 'scoped memory for tpu_custom_call.1']
    #allocation7 [shape = 'u8[1536]{0}', space=vmem, size = 0x800, scoped, tag = 'input window, operand 5, single buffered']
    #allocation8 [shape = 'u8[65536]{0}', space=vmem, size = 0x10000, scoped, tag = 'input window, operand 6, single buffered']
    #allocation9 [shape = 's32[1]{0}', space=sflag, size = 0x4, scoped, tag = 'scoped memory for tpu_custom_call.1']
    #allocation10 [shape = 'u8[512]{0}', space=vmem, size = 0x400, scoped, tag = 'input window, operand 7, single buffered']
    #allocation11 [shape = 'u8[512]{0}', space=vmem, size = 0x400, scoped, tag = 'input window, operand 8, single buffered']
    #allocation12 [shape = 's32[1]{0}', space=sflag, size = 0x4, scoped, tag = 'scoped memory for tpu_custom_call.1']
    #allocation13 [shape = 'u8[512]{0}', space=vmem, size = 0x400, scoped, tag = 'output window, operand 0, single buffered']
    #allocation14 [shape = 'u8[512]{0}', space=vmem, size = 0x400, scoped, tag = 'output window, operand 1, single buffered']
    #allocation15 [shape = 's32[1]{0}', space=sflag, size = 0x4, scoped, tag = 'scoped memory for tpu_custom_call.1']
    #allocation16 [shape = 'u8[512]{0}', space=vmem, size = 0x400, scoped, tag = 'output window, operand 2, single buffered']
    %17 = vsyncpa [#allocation3], 0
    %18 = vsyncpa [#allocation6], 0
    %19 = vsyncpa [#allocation9], 0
    %20 = vsyncpa [#allocation12], 0
    %21 = vsyncpa [#allocation4], 0
    %22 = vsyncpa [#allocation15], 0
    // Predicated region
    $region2: #{tpu_custom_call.1} parent=1 // pred_check
      _
    $region3: #{tpu_custom_call.1} parent=1 // pred_check_branch
      %24 = sbr.rel (0) target = $region5
    $region4: #{tpu_custom_call.1} parent=1 // pred_region
      _
    $region5: #{tpu_custom_call.1} parent=1 // pred_fallthru
      _
    // Predicated region
    $region6: #{tpu_custom_call.1} parent=1 // pred_check
      _
    $region7: #{tpu_custom_call.1} parent=1 // pred_check_branch
      %26 = sbr.rel (0) target = $region9
    $region8: #{tpu_custom_call.1} parent=1 // pred_region
      _
    $region9: #{tpu_custom_call.1} parent=1 // pred_fallthru
      _
    // Predicated region
    $region10: #{tpu_custom_call.1} parent=1 // pred_check
      _
    $region11: #{tpu_custom_call.1} parent=1 // pred_check_branch
      %28 = sbr.rel (0) target = $region13
    $region12: #{tpu_custom_call.1} parent=1 // pred_region
      %30 = vsyncadd [#allocation3], 0
      %s31 = sshll.u32 %s2, 4
      %s32 = int_to_ptr.hbm [resolvable:$true] %s31
      %s33 = sshll.u32 [#allocation2], 4
      %s34 = int_to_ptr.vmem [resolvable:$true] %s33
      %39 = dma.hbm_to_vmem [thread:$0]  %s32, 6144, %s34, [#allocation3], 384, 384, 24
    $region13: #{tpu_custom_call.1} parent=1 // pred_fallthru
      _
    // Predicated region
    $region14: #{tpu_custom_call.1} parent=1 // pred_check
      _
    $region15: #{tpu_custom_call.1} parent=1 // pred_check_branch
      %41 = sbr.rel (0) target = $region17
    $region16: #{tpu_custom_call.1} parent=1 // pred_region
      %43 = vsyncadd [#allocation6], 0
      %s44 = sshll.u32 %s3, 4
      %s45 = int_to_ptr.hbm [resolvable:$true] %s44
      %s46 = sshll.u32 [#allocation5], 4
      %s47 = int_to_ptr.vmem [resolvable:$true] %s46
      %52 = dma.hbm_to_vmem [thread:$0]  %s45, 6144, %s47, [#allocation6], 384, 384, 24
    $region17: #{tpu_custom_call.1} parent=1 // pred_fallthru
      _
    // Predicated region
    $region18: #{tpu_custom_call.1} parent=1 // pred_check
      _
    $region19: #{tpu_custom_call.1} parent=1 // pred_check_branch
      %54 = sbr.rel (0) target = $region21
    $region20: #{tpu_custom_call.1} parent=1 // pred_region
      _
    $region21: #{tpu_custom_call.1} parent=1 // pred_fallthru
      _
    // Predicated region
    $region22: #{tpu_custom_call.1} parent=1 // pred_check
      _
    $region23: #{tpu_custom_call.1} parent=1 // pred_check_branch
      %56 = sbr.rel (0) target = $region25
    $region24: #{tpu_custom_call.1} parent=1 // pred_region
      %58 = vsyncadd [#allocation6], 0
      %s60 = sshll.u32 %s5, 4
      %s61 = int_to_ptr.hbm [resolvable:$true] %s60
      %s62 = sshll.u32 [#allocation7], 4
      %s63 = int_to_ptr.vmem [resolvable:$true] %s62
      %65 = dma.hbm_to_vmem [thread:$0]  %s61, 48, %s63, [#allocation6]
    $region25: #{tpu_custom_call.1} parent=1 // pred_fallthru
      _
    // Predicated region
    $region26: #{tpu_custom_call.1} parent=1 // pred_check
      _
    $region27: #{tpu_custom_call.1} parent=1 // pred_check_branch
      %67 = sbr.rel (0) target = $region29
    $region28: #{tpu_custom_call.1} parent=1 // pred_region
      %69 = vsyncadd [#allocation9], 0
      %s70 = sshll.u32 %s6, 4
      %s71 = int_to_ptr.hbm [resolvable:$true] %s70
      %s72 = sshll.u32 [#allocation8], 4
      %s73 = int_to_ptr.vmem [resolvable:$true] %s72
      %78 = dma.hbm_to_vmem [thread:$0]  %s71, 2048, %s73, [#allocation9], 128, 128, 8
    $region29: #{tpu_custom_call.1} parent=1 // pred_fallthru
      _
    // Predicated region
    $region30: #{tpu_custom_call.1} parent=1 // pred_check
      _
    $region31: #{tpu_custom_call.1} parent=1 // pred_check_branch
      %80 = sbr.rel (0) target = $region33
    $region32: #{tpu_custom_call.1} parent=1 // pred_region
      %82 = vsyncadd [#allocation9], 0
      %s84 = sshll.u32 %s7, 4
      %s85 = int_to_ptr.hbm [resolvable:$true] %s84
      %s86 = sshll.u32 [#allocation10], 4
      %s87 = int_to_ptr.vmem [resolvable:$true] %s86
      %89 = dma.hbm_to_vmem [thread:$0]  %s85, 16, %s87, [#allocation9]
    $region33: #{tpu_custom_call.1} parent=1 // pred_fallthru
      _
    // Predicated region
    $region34: #{tpu_custom_call.1} parent=1 // pred_check
      _
    $region35: #{tpu_custom_call.1} parent=1 // pred_check_branch
      %91 = sbr.rel (0) target = $region37
    $region36: #{tpu_custom_call.1} parent=1 // pred_region
      %93 = vsyncadd [#allocation12], 0
      %s95 = sshll.u32 %s8, 4
      %s96 = int_to_ptr.hbm [resolvable:$true] %s95
      %s97 = sshll.u32 [#allocation11], 4
      %s98 = int_to_ptr.vmem [resolvable:$true] %s97
      %100 = dma.hbm_to_vmem [thread:$0]  %s96, 16, %s98, [#allocation12]
    $region37: #{tpu_custom_call.1} parent=1 // pred_fallthru
      _
    // Predicated region
    $region38: #{tpu_custom_call.1} parent=1 // pred_check
      _
    $region39: #{tpu_custom_call.1} parent=1 // pred_check_branch
      %102 = sbr.rel (0) target = $region41
    $region40: #{tpu_custom_call.1} parent=1 // pred_region
      %104 = dma.done [#allocation3], 6144
    $region41: #{tpu_custom_call.1} parent=1 // pred_fallthru
      _
    // Predicated region
    $region42: #{tpu_custom_call.1} parent=1 // pred_check
      _
    $region43: #{tpu_custom_call.1} parent=1 // pred_check_branch
      %106 = sbr.rel (0) target = $region45
    $region44: #{tpu_custom_call.1} parent=1 // pred_region
      %108 = dma.done [#allocation6], 6144
    $region45: #{tpu_custom_call.1} parent=1 // pred_fallthru
      _
    // Predicated region
    $region46: #{tpu_custom_call.1} parent=1 // pred_check
      _
    $region47: #{tpu_custom_call.1} parent=1 // pred_check_branch
      %110 = sbr.rel (0) target = $region49
    $region48: #{tpu_custom_call.1} parent=1 // pred_region
      %112 = dma.done [#allocation6], 48
    $region49: #{tpu_custom_call.1} parent=1 // pred_fallthru
      _
    // Predicated region
    $region50: #{tpu_custom_call.1} parent=1 // pred_check
      _
    $region51: #{tpu_custom_call.1} parent=1 // pred_check_branch
      %114 = sbr.rel (0) target = $region53
    $region52: #{tpu_custom_call.1} parent=1 // pred_region
      %116 = dma.done [#allocation9], 2048
    $region53: #{tpu_custom_call.1} parent=1 // pred_fallthru
      _
    // Predicated region
    $region54: #{tpu_custom_call.1} parent=1 // pred_check
      _
    $region55: #{tpu_custom_call.1} parent=1 // pred_check_branch
      %118 = sbr.rel (0) target = $region57
    $region56: #{tpu_custom_call.1} parent=1 // pred_region
      %120 = dma.done [#allocation9], 16
    $region57: #{tpu_custom_call.1} parent=1 // pred_fallthru
      _
    // Predicated region
    $region58: #{tpu_custom_call.1} parent=1 // pred_check
      _
    $region59: #{tpu_custom_call.1} parent=1 // pred_check_branch
      %122 = sbr.rel (0) target = $region61
    $region60: #{tpu_custom_call.1} parent=1 // pred_region
      %124 = dma.done [#allocation12], 16
    $region61: #{tpu_custom_call.1} parent=1 // pred_fallthru
      _
    %v125 = vld [vmem:[%s0] sm:$0x1]
    %v126 = vld [vmem:[%s1] sm:$0x1]
    %v127 = vld [vmem:[#allocation2] sm:$0xff]
    %v128 = vld [vmem:[#allocation2 + $0x8] sm:$0xff]
    %v129 = vld [vmem:[#allocation2 + $0x10] sm:$0xff]
    %v130 = vld [vmem:[#allocation2 + $0x18] sm:$0xff]
    %v131 = vld [vmem:[#allocation2 + $0x20] sm:$0xff]
    %v132 = vld [vmem:[#allocation2 + $0x28] sm:$0xff]
    %v133 = vld [vmem:[#allocation2 + $0x30] sm:$0xff]
    %v134 = vld [vmem:[#allocation2 + $0x38] sm:$0xff]
    %v135 = vld [vmem:[#allocation2 + $0x40] sm:$0xff]
    %v136 = vld [vmem:[#allocation2 + $0x48] sm:$0xff]
    %v137 = vld [vmem:[#allocation2 + $0x50] sm:$0xff]
    %v138 = vld [vmem:[#allocation2 + $0x58] sm:$0xff]
    %v139 = vld [vmem:[#allocation2 + $0x60] sm:$0xff]
    %v140 = vld [vmem:[#allocation2 + $0x68] sm:$0xff]
    %v141 = vld [vmem:[#allocation2 + $0x70] sm:$0xff]
    %v142 = vld [vmem:[#allocation2 + $0x78] sm:$0xff]
    %v143 = vld [vmem:[#allocation2 + $0x80] sm:$0xff]
    %v144 = vld [vmem:[#allocation2 + $0x88] sm:$0xff]
    %v145 = vld [vmem:[#allocation2 + $0x90] sm:$0xff]
    %v146 = vld [vmem:[#allocation2 + $0x98] sm:$0xff]
    %v147 = vld [vmem:[#allocation2 + $0xa0] sm:$0xff]
    %v148 = vld [vmem:[#allocation2 + $0xa8] sm:$0xff]
    %v149 = vld [vmem:[#allocation2 + $0xb0] sm:$0xff]
    %v150 = vld [vmem:[#allocation2 + $0xb8] sm:$0xff]
    %v151 = vld [vmem:[#allocation2 + $0xc0] sm:$0xff]
    %v152 = vld [vmem:[#allocation2 + $0xc8] sm:$0xff]
    %v153 = vld [vmem:[#allocation2 + $0xd0] sm:$0xff]
    %v154 = vld [vmem:[#allocation2 + $0xd8] sm:$0xff]
    %v155 = vld [vmem:[#allocation2 + $0xe0] sm:$0xff]
    %v156 = vld [vmem:[#allocation2 + $0xe8] sm:$0xff]
    %v157 = vld [vmem:[#allocation2 + $0xf0] sm:$0xff]
    %v158 = vld [vmem:[#allocation2 + $0xf8] sm:$0xff]
    %v159 = vld [vmem:[#allocation2 + $0x100] sm:$0xff]
    %v160 = vld [vmem:[#allocation2 + $0x108] sm:$0xff]
    %v161 = vld [vmem:[#allocation2 + $0x110] sm:$0xff]
    %v162 = vld [vmem:[#allocation2 + $0x118] sm:$0xff]
    %v163 = vld [vmem:[#allocation2 + $0x120] sm:$0xff]
    %v164 = vld [vmem:[#allocation2 + $0x128] sm:$0xff]
    %v165 = vld [vmem:[#allocation2 + $0x130] sm:$0xff]
    %v166 = vld [vmem:[#allocation2 + $0x138] sm:$0xff]
    %v167 = vld [vmem:[#allocation2 + $0x140] sm:$0xff]
    %v168 = vld [vmem:[#allocation2 + $0x148] sm:$0xff]
    %v169 = vld [vmem:[#allocation2 + $0x150] sm:$0xff]
    %v170 = vld [vmem:[#allocation2 + $0x158] sm:$0xff]
    %v171 = vld [vmem:[#allocation2 + $0x160] sm:$0xff]
    %v172 = vld [vmem:[#allocation2 + $0x168] sm:$0xff]
    %v173 = vld [vmem:[#allocation2 + $0x170] sm:$0xff]
    %v174 = vld [vmem:[#allocation2 + $0x178] sm:$0xff]
    %v175 = vld [vmem:[%s4] sm:$0x7]
    %v177 = vperm.slane %v175, 0
    %v178 = vperm.slane %v175, 1
    %v179 = vperm.slane %v175, 2
    %183 = vmatpush.msra.mxu0 %v172
    %184 = vmatpush.msra.mxu0 %v169
    %185 = vmatpush.msra.mxu0 %v166
    %186 = vmatpush.msra.mxu0 %v163
    %187 = vmatpush.msra.mxu0 %v160
    %188 = vmatpush.msra.mxu0 %v157
    %189 = vmatpush.msra.mxu0 %v154
    %190 = vmatpush.msra.mxu0 %v151
    %191 = vmatpush.msra.mxu0 %v148
    %192 = vmatpush.msra.mxu0 %v145
    %193 = vmatpush.msra.mxu0 %v142
    %194 = vmatpush.msra.mxu0 %v139
    %195 = vmatpush.msra.mxu0 %v136
    %196 = vmatpush.msra.mxu0 %v133
    %197 = vmatpush.msra.mxu0 %v130
    %198 = vmatpush.msra.mxu0 %v127
    %199 = vmatmul.f32.gmra.mxu0 %v125
    %v200 = vpop.f32.mrf.mxu0
    %v201 = vadd.f32 %v177, %v200
    %202 = vdwg.mxu0
    %203 = vmatpush.msra.mxu0 %v173
    %204 = vmatpush.msra.mxu0 %v170
    %205 = vmatpush.msra.mxu0 %v167
    %206 = vmatpush.msra.mxu0 %v164
    %207 = vmatpush.msra.mxu0 %v161
    %208 = vmatpush.msra.mxu0 %v158
    %209 = vmatpush.msra.mxu0 %v155
    %210 = vmatpush.msra.mxu0 %v152
    %211 = vmatpush.msra.mxu0 %v149
    %212 = vmatpush.msra.mxu0 %v146
    %213 = vmatpush.msra.mxu0 %v143
    %214 = vmatpush.msra.mxu0 %v140
    %215 = vmatpush.msra.mxu0 %v137
    %216 = vmatpush.msra.mxu0 %v134
    %217 = vmatpush.msra.mxu0 %v131
    %218 = vmatpush.msra.mxu0 %v128
    %219 = vmatmul.f32.gmra.mxu0 %v125
    %v220 = vpop.f32.mrf.mxu0
    %v221 = vadd.f32 %v178, %v220
    %222 = vdwg.mxu0
    %223 = vmatpush.msra.mxu0 %v174
    %224 = vmatpush.msra.mxu0 %v171
    %225 = vmatpush.msra.mxu0 %v168
    %226 = vmatpush.msra.mxu0 %v165
    %227 = vmatpush.msra.mxu0 %v162
    %228 = vmatpush.msra.mxu0 %v159
    %229 = vmatpush.msra.mxu0 %v156
    %230 = vmatpush.msra.mxu0 %v153
    %231 = vmatpush.msra.mxu0 %v150
    %232 = vmatpush.msra.mxu0 %v147
    %233 = vmatpush.msra.mxu0 %v144
    %234 = vmatpush.msra.mxu0 %v141
    %235 = vmatpush.msra.mxu0 %v138
    %236 = vmatpush.msra.mxu0 %v135
    %237 = vmatpush.msra.mxu0 %v132
    %238 = vmatpush.msra.mxu0 %v129
    %239 = vmatmul.f32.gmra.mxu0 %v125
    %v240 = vpop.f32.mrf.mxu0
    %v241 = vadd.f32 %v179, %v240
    %242 = vdwg.mxu0
    %v243 = vld [vmem:[#allocation5] sm:$0xff]
    %v244 = vld [vmem:[#allocation5 + $0x8] sm:$0xff]
    %v245 = vld [vmem:[#allocation5 + $0x10] sm:$0xff]
    %v246 = vld [vmem:[#allocation5 + $0x18] sm:$0xff]
    %v247 = vld [vmem:[#allocation5 + $0x20] sm:$0xff]
    %v248 = vld [vmem:[#allocation5 + $0x28] sm:$0xff]
    %v249 = vld [vmem:[#allocation5 + $0x30] sm:$0xff]
    %v250 = vld [vmem:[#allocation5 + $0x38] sm:$0xff]
    %v251 = vld [vmem:[#allocation5 + $0x40] sm:$0xff]
    %v252 = vld [vmem:[#allocation5 + $0x48] sm:$0xff]
    %v253 = vld [vmem:[#allocation5 + $0x50] sm:$0xff]
    %v254 = vld [vmem:[#allocation5 + $0x58] sm:$0xff]
    %v255 = vld [vmem:[#allocation5 + $0x60] sm:$0xff]
    %v256 = vld [vmem:[#allocation5 + $0x68] sm:$0xff]
    %v257 = vld [vmem:[#allocation5 + $0x70] sm:$0xff]
    %v258 = vld [vmem:[#allocation5 + $0x78] sm:$0xff]
    %v259 = vld [vmem:[#allocation5 + $0x80] sm:$0xff]
    %v260 = vld [vmem:[#allocation5 + $0x88] sm:$0xff]
    %v261 = vld [vmem:[#allocation5 + $0x90] sm:$0xff]
    %v262 = vld [vmem:[#allocation5 + $0x98] sm:$0xff]
    %v263 = vld [vmem:[#allocation5 + $0xa0] sm:$0xff]
    %v264 = vld [vmem:[#allocation5 + $0xa8] sm:$0xff]
    %v265 = vld [vmem:[#allocation5 + $0xb0] sm:$0xff]
    %v266 = vld [vmem:[#allocation5 + $0xb8] sm:$0xff]
    %v267 = vld [vmem:[#allocation5 + $0xc0] sm:$0xff]
    %v268 = vld [vmem:[#allocation5 + $0xc8] sm:$0xff]
    %v269 = vld [vmem:[#allocation5 + $0xd0] sm:$0xff]
    %v270 = vld [vmem:[#allocation5 + $0xd8] sm:$0xff]
    %v271 = vld [vmem:[#allocation5 + $0xe0] sm:$0xff]
    %v272 = vld [vmem:[#allocation5 + $0xe8] sm:$0xff]
    %v273 = vld [vmem:[#allocation5 + $0xf0] sm:$0xff]
    %v274 = vld [vmem:[#allocation5 + $0xf8] sm:$0xff]
    %v275 = vld [vmem:[#allocation5 + $0x100] sm:$0xff]
    %v276 = vld [vmem:[#allocation5 + $0x108] sm:$0xff]
    %v277 = vld [vmem:[#allocation5 + $0x110] sm:$0xff]
    %v278 = vld [vmem:[#allocation5 + $0x118] sm:$0xff]
    %v279 = vld [vmem:[#allocation5 + $0x120] sm:$0xff]
    %v280 = vld [vmem:[#allocation5 + $0x128] sm:$0xff]
    %v281 = vld [vmem:[#allocation5 + $0x130] sm:$0xff]
    %v282 = vld [vmem:[#allocation5 + $0x138] sm:$0xff]
    %v283 = vld [vmem:[#allocation5 + $0x140] sm:$0xff]
    %v284 = vld [vmem:[#allocation5 + $0x148] sm:$0xff]
    %v285 = vld [vmem:[#allocation5 + $0x150] sm:$0xff]
    %v286 = vld [vmem:[#allocation5 + $0x158] sm:$0xff]
    %v287 = vld [vmem:[#allocation5 + $0x160] sm:$0xff]
    %v288 = vld [vmem:[#allocation5 + $0x168] sm:$0xff]
    %v289 = vld [vmem:[#allocation5 + $0x170] sm:$0xff]
    %v290 = vld [vmem:[#allocation5 + $0x178] sm:$0xff]
    %v291 = vld [vmem:[#allocation7] sm:$0x7]
    %v293 = vperm.slane %v291, 0
    %v294 = vperm.slane %v291, 1
    %v295 = vperm.slane %v291, 2
    %299 = vmatpush.msra.mxu0 %v288
    %300 = vmatpush.msra.mxu0 %v285
    %301 = vmatpush.msra.mxu0 %v282
    %302 = vmatpush.msra.mxu0 %v279
    %303 = vmatpush.msra.mxu0 %v276
    %304 = vmatpush.msra.mxu0 %v273
    %305 = vmatpush.msra.mxu0 %v270
    %306 = vmatpush.msra.mxu0 %v267
    %307 = vmatpush.msra.mxu0 %v264
    %308 = vmatpush.msra.mxu0 %v261
    %309 = vmatpush.msra.mxu0 %v258
    %310 = vmatpush.msra.mxu0 %v255
    %311 = vmatpush.msra.mxu0 %v252
    %312 = vmatpush.msra.mxu0 %v249
    %313 = vmatpush.msra.mxu0 %v246
    %314 = vmatpush.msra.mxu0 %v243
    %315 = vmatmul.f32.gmra.mxu0 %v126
    %v316 = vpop.f32.mrf.mxu0
    %v317 = vadd.f32 %v293, %v316
    %318 = vdwg.mxu0
    %319 = vmatpush.msra.mxu0 %v289
    %320 = vmatpush.msra.mxu0 %v286
    %321 = vmatpush.msra.mxu0 %v283
    %322 = vmatpush.msra.mxu0 %v280
    %323 = vmatpush.msra.mxu0 %v277
    %324 = vmatpush.msra.mxu0 %v274
    %325 = vmatpush.msra.mxu0 %v271
    %326 = vmatpush.msra.mxu0 %v268
    %327 = vmatpush.msra.mxu0 %v265
    %328 = vmatpush.msra.mxu0 %v262
    %329 = vmatpush.msra.mxu0 %v259
    %330 = vmatpush.msra.mxu0 %v256
    %331 = vmatpush.msra.mxu0 %v253
    %332 = vmatpush.msra.mxu0 %v250
    %333 = vmatpush.msra.mxu0 %v247
    %334 = vmatpush.msra.mxu0 %v244
    %335 = vmatmul.f32.gmra.mxu0 %v126
    %v336 = vpop.f32.mrf.mxu0
    %v337 = vadd.f32 %v294, %v336
    %338 = vdwg.mxu0
    %339 = vmatpush.msra.mxu0 %v290
    %340 = vmatpush.msra.mxu0 %v287
    %341 = vmatpush.msra.mxu0 %v284
    %342 = vmatpush.msra.mxu0 %v281
    %343 = vmatpush.msra.mxu0 %v278
    %344 = vmatpush.msra.mxu0 %v275
    %345 = vmatpush.msra.mxu0 %v272
    %346 = vmatpush.msra.mxu0 %v269
    %347 = vmatpush.msra.mxu0 %v266
    %348 = vmatpush.msra.mxu0 %v263
    %349 = vmatpush.msra.mxu0 %v260
    %350 = vmatpush.msra.mxu0 %v257
    %351 = vmatpush.msra.mxu0 %v254
    %352 = vmatpush.msra.mxu0 %v251
    %353 = vmatpush.msra.mxu0 %v248
    %354 = vmatpush.msra.mxu0 %v245
    %355 = vmatmul.f32.gmra.mxu0 %v126
    %v356 = vpop.f32.mrf.mxu0
    %v357 = vadd.f32 %v295, %v356
    %358 = vdwg.mxu0
    %v359 = vadd.f32 %v201, %v317
    %v360 = vxor.u32 %v359, 2147483648
    %v361 = vmul.f32 %v360, 1.442695
    %v362 = vpow.pop %v361
    %v363 = vadd.f32 %v362, 1.0
    %v364 = vrcp.pop %v363
    %v365 = vmul.f32 %v363, %v364
    %v366 = vsub.f32 1.0, %v365
    %v367 = vmul.f32 %v364, %v366
    %v368 = vadd.f32 %v364, %v367
    %vm369 = vweird.f32 %v363
    %vm370 = vweird.f32 %v364
    %vm371 = vmor %vm369, %vm370
    %v372 = vsel %vm371, %v364, %v368
    %v373 = vand.u32 2147483647, %v363
    %vm374 = vcmp.eq.f32.partialorder %v373, 8.507059e+37
    %v375 = vand.u32 %v363, 2147483648
    %v376 = vor.u32 1.1754944e-38, %v375
    %v377 = vsel %vm374, %v376, %v372
    %v378 = vmul.f32 1.0, %v377
    %v379 = vadd.f32 %v221, %v337
    %v380 = vxor.u32 %v379, 2147483648
    %v381 = vmul.f32 %v380, 1.442695
    %v382 = vpow.pop %v381
    %v383 = vadd.f32 %v382, 1.0
    %v384 = vrcp.pop %v383
    %v385 = vmul.f32 %v383, %v384
    %v386 = vsub.f32 1.0, %v385
    %v387 = vmul.f32 %v384, %v386
    %v388 = vadd.f32 %v384, %v387
    %vm389 = vweird.f32 %v383
    %vm390 = vweird.f32 %v384
    %vm391 = vmor %vm389, %vm390
    %v392 = vsel %vm391, %v384, %v388
    %v393 = vand.u32 2147483647, %v383
    %vm394 = vcmp.eq.f32.partialorder %v393, 8.507059e+37
    %v395 = vand.u32 %v383, 2147483648
    %v396 = vor.u32 1.1754944e-38, %v395
    %v397 = vsel %vm394, %v396, %v392
    %v398 = vmul.f32 1.0, %v397
    %v399 = vmul.f32 %v378, %v357
    %v400 = vadd.f32 %v241, %v399
    %v401 = vtanh.pop %v400
    %v402 = vsub.f32 1.0, %v398
    %v403 = vmul.f32 %v402, %v401
    %v404 = vmul.f32 %v398, %v126
    %v405 = vadd.f32 %v403, %v404
    %406 = vst [vmem:[#allocation14] sm:$0x1] %v405
    %v407 = vld [vmem:[#allocation8] sm:$0xff]
    %v408 = vld [vmem:[#allocation8 + $0x8] sm:$0xff]
    %v409 = vld [vmem:[#allocation8 + $0x10] sm:$0xff]
    %v410 = vld [vmem:[#allocation8 + $0x18] sm:$0xff]
    %v411 = vld [vmem:[#allocation8 + $0x20] sm:$0xff]
    %v412 = vld [vmem:[#allocation8 + $0x28] sm:$0xff]
    %v413 = vld [vmem:[#allocation8 + $0x30] sm:$0xff]
    %v414 = vld [vmem:[#allocation8 + $0x38] sm:$0xff]
    %v415 = vld [vmem:[#allocation8 + $0x40] sm:$0xff]
    %v416 = vld [vmem:[#allocation8 + $0x48] sm:$0xff]
    %v417 = vld [vmem:[#allocation8 + $0x50] sm:$0xff]
    %v418 = vld [vmem:[#allocation8 + $0x58] sm:$0xff]
    %v419 = vld [vmem:[#allocation8 + $0x60] sm:$0xff]
    %v420 = vld [vmem:[#allocation8 + $0x68] sm:$0xff]
    %v421 = vld [vmem:[#allocation8 + $0x70] sm:$0xff]
    %v422 = vld [vmem:[#allocation8 + $0x78] sm:$0xff]
    %v423 = vld [vmem:[#allocation10] sm:$0x1]
    %424 = vmatpush.msra.mxu0 %v422
    %425 = vmatpush.msra.mxu0 %v421
    %426 = vmatpush.msra.mxu0 %v420
    %427 = vmatpush.msra.mxu0 %v419
    %428 = vmatpush.msra.mxu0 %v418
    %429 = vmatpush.msra.mxu0 %v417
    %430 = vmatpush.msra.mxu0 %v416
    %431 = vmatpush.msra.mxu0 %v415
    %432 = vmatpush.msra.mxu0 %v414
    %433 = vmatpush.msra.mxu0 %v413
    %434 = vmatpush.msra.mxu0 %v412
    %435 = vmatpush.msra.mxu0 %v411
    %436 = vmatpush.msra.mxu0 %v410
    %437 = vmatpush.msra.mxu0 %v409
    %438 = vmatpush.msra.mxu0 %v408
    %439 = vmatpush.msra.mxu0 %v407
    %440 = vmatmul.f32.gmra.mxu0 %v405
    %v441 = vpop.f32.mrf.mxu0
    %v442 = vadd.f32 %v423, %v441
    %443 = vdwg.mxu0
    %v444 = vxor.u32 %v442, 2147483648
    %v445 = vmul.f32 %v444, 1.442695
    %v446 = vpow.pop %v445
    %v447 = vadd.f32 %v446, 1.0
    %v448 = vrcp.pop %v447
    %v449 = vmul.f32 %v447, %v448
    %v450 = vsub.f32 1.0, %v449
    %v451 = vmul.f32 %v448, %v450
    %v452 = vadd.f32 %v448, %v451
    %vm453 = vweird.f32 %v447
    %vm454 = vweird.f32 %v448
    %vm455 = vmor %vm453, %vm454
    %v456 = vsel %vm455, %v448, %v452
    %v457 = vand.u32 2147483647, %v447
    %vm458 = vcmp.eq.f32.partialorder %v457, 8.507059e+37
    %v459 = vand.u32 %v447, 2147483648
    %v460 = vor.u32 1.1754944e-38, %v459
    %v461 = vsel %vm458, %v460, %v456
    %v462 = vmul.f32 1.0, %v461
    %463 = vst [vmem:[#allocation13] sm:$0x1] %v462
    %v464 = vlaneseq
    %v465 = vand.u32 %v464, 127
    %vm466 = vcmask 1040384
    %v467 = vsel %vm466, %v442, -inf
    %468 = vmax.xlane.f32.xlu0 %v467
    %v469 = vpop.xlane.xlu0 %468
    %vm470 = vcmp.eq.f32.partialorder %v442, %v469
    %v471 = vsel %vm470, %v465, 128
    %v472 = vsel %vm466, %v471, 2147483647
    %v473 = vand.u32 %v472, 65535
    %v474 = vshra.s32 %v472, 16
    %v475 = vcvt.s32.f32 %v473
    %v476 = vcvt.s32.f32 %v474
    %477 = vmin.xlane.f32.xlu0 %v476
    %v478 = vpop.xlane.xlu0 %477
    %vm479 = vcmp.eq.f32.partialorder %v476, %v478
    %v480 = vsel %vm479, %v475, inf
    %481 = vmin.xlane.f32.xlu0 %v480
    %v482 = vpop.xlane.xlu0 %481
    %v483 = vcvt.f32.s32 %v482
    %v484 = vcvt.f32.s32 %v478
    %v485 = vshll.u32 %v484, 16
    %v486 = vadd.s32 %v485, %v483
    %v487 = vld [vmem:[#allocation11] sm:$0x1]
    %vm488 = vcmp.eq.s32.totalorder %v465, %v486
    %v489 = vsel %vm488, 1, %v487
    %490 = vst [vmem:[#allocation16] sm:$0x1] %v489
    // Predicated region
    $region62: #{tpu_custom_call.1} parent=1 // pred_check
      _
    $region63: #{tpu_custom_call.1} parent=1 // pred_check_branch
      %492 = sbr.rel (0) target = $region65
    $region64: #{tpu_custom_call.1} parent=1 // pred_region
      %494 = vsyncadd [#allocation4], 0
      %s496 = sshll.u32 [#allocation13], 4
      %s497 = int_to_ptr.vmem [resolvable:$true] %s496
      %s498 = sshll.u32 %s9, 4
      %s499 = int_to_ptr.hbm [resolvable:$true] %s498
      %501 = dma.vmem_to_hbm [thread:$0]  %s497, 16, %s499, [#allocation4]
    $region65: #{tpu_custom_call.1} parent=1 // pred_fallthru
      _
    // Predicated region
    $region66: #{tpu_custom_call.1} parent=1 // pred_check
      _
    $region67: #{tpu_custom_call.1} parent=1 // pred_check_branch
      %503 = sbr.rel (0) target = $region69
    $region68: #{tpu_custom_call.1} parent=1 // pred_region
      %505 = vsyncadd [#allocation15], 0
      %s507 = sshll.u32 [#allocation14], 4
      %s508 = int_to_ptr.vmem [resolvable:$true] %s507
      %s509 = sshll.u32 %s10, 4
      %s510 = int_to_ptr.hbm [resolvable:$true] %s509
      %512 = dma.vmem_to_hbm [thread:$0]  %s508, 16, %s510, [#allocation15]
    $region69: #{tpu_custom_call.1} parent=1 // pred_fallthru
      _
    // Predicated region
    $region70: #{tpu_custom_call.1} parent=1 // pred_check
      _
    $region71: #{tpu_custom_call.1} parent=1 // pred_check_branch
      %514 = sbr.rel (0) target = $region73
    $region72: #{tpu_custom_call.1} parent=1 // pred_region
      %516 = vsyncadd [#allocation15], 0
      %s518 = sshll.u32 [#allocation16], 4
      %s519 = int_to_ptr.vmem [resolvable:$true] %s518
      %s520 = sshll.u32 %s11, 4
      %s521 = int_to_ptr.hbm [resolvable:$true] %s520
      %523 = dma.vmem_to_hbm [thread:$0]  %s519, 16, %s521, [#allocation15]
    $region73: #{tpu_custom_call.1} parent=1 // pred_fallthru
      _
    // Predicated region
    $region74: #{tpu_custom_call.1} parent=1 // pred_check
      _
    $region75: #{tpu_custom_call.1} parent=1 // pred_check_branch
      %525 = sbr.rel (0) target = $region77
    $region76: #{tpu_custom_call.1} parent=1 // pred_region
      %527 = dma.done [#allocation4], 16
    $region77: #{tpu_custom_call.1} parent=1 // pred_fallthru
      _
    // Predicated region
    $region78: #{tpu_custom_call.1} parent=1 // pred_check
      _
    $region79: #{tpu_custom_call.1} parent=1 // pred_check_branch
      %529 = sbr.rel (0) target = $region81
    $region80: #{tpu_custom_call.1} parent=1 // pred_region
      %531 = dma.done [#allocation15], 16
    $region81: #{tpu_custom_call.1} parent=1 // pred_fallthru
      _
    // Predicated region
    $region82: #{tpu_custom_call.1} parent=1 // pred_check
      _
    $region83: #{tpu_custom_call.1} parent=1 // pred_check_branch
      %533 = sbr.rel (0) target = $region85
    $region84: #{tpu_custom_call.1} parent=1 // pred_region
      %535 = dma.done [#allocation15], 16
    $region85: #{tpu_custom_call.1} parent=1 // pred_fallthru
      _
    %536 = vsyncpa [#allocation3], 1
    %537 = vsyncpa [#allocation6], 1
    %538 = vsyncpa [#allocation9], 1
    %539 = vsyncpa [#allocation12], 1
    %540 = vsyncpa [#allocation4], 1
    %541 = vsyncpa [#allocation15], 1

</llo_original>
